<compile_context>
chip_gen: v7x
topology: tpu7x:2x2x1
jax: 0.10.0
libtpu: 0.0.40
codegen_flags: <defaults>
</compile_context>

<pallas_src>
import functools

import jax
import jax.numpy as jnp
from jax.experimental import pallas as pl
from jax.experimental.pallas import tpu as pltpu


def _round_up(x, m):
    return (x + m - 1) // m * m


def glove_loss_kernel(ce_ref, te_ref, side_ref, loss_ref):
    # Upcast (possibly bf16) embeddings to f32 for the multiply/accumulate.
    ce = ce_ref[...].astype(jnp.float32)                # (TM, E)
    te = te_ref[...].astype(jnp.float32)                # (TM, E)
    inner = jnp.sum(ce * te, axis=1, keepdims=True)     # (TM, 1) lane reduce

    side = side_ref[...]                                # (TM, 4) f32
    cb = side[:, 0:1]   # center bias
    tb = side[:, 1:2]   # target bias
    co = side[:, 2:3]   # co-occurrence
    w = side[:, 3:4]    # weighting

    err = inner + cb + tb - co
    loss_ref[...] = w * err * err                       # (TM, 1)


@functools.partial(jax.jit, static_argnames=("tm_max", "embed_dtype"))
def glove_forward(params, center_words, target_words, co_occurrences,
                  weightings, *, tm_max=1024, embed_dtype=jnp.bfloat16):
    emb_v, emb_u, v_bias, u_bias = params
    batch = center_words.shape[0]
    embed = emb_v.shape[1]
    ebytes = jnp.dtype(embed_dtype).itemsize

    # Glue: embedding lookups (gather) in plain JAX; cast the big operands to
    # bf16 to halve HBM traffic into the kernel.
    ce = jnp.take(emb_v, center_words, axis=0).astype(embed_dtype)   # (B, E)
    te = jnp.take(emb_u, target_words, axis=0).astype(embed_dtype)   # (B, E)
    cb = jnp.take(v_bias, center_words, axis=0)                      # (B, 1)
    tb = jnp.take(u_bias, target_words, axis=0)                      # (B, 1)
    co = co_occurrences.reshape(-1, 1).astype(jnp.float32)           # (B, 1)
    w = weightings.reshape(-1, 1).astype(jnp.float32)                # (B, 1)
    side = jnp.concatenate([cb, tb, co, w], axis=1)                  # (B, 4)

    # Rows per tile: multiple of 8 (sublane layout), capped by a ~4 MiB/buffer
    # VMEM budget (2 inputs x 2 pipeline buffers => <= 16 MiB of ce/te tiles).
    rows_vmem = max(8, ((4 * 1024 * 1024) // max(1, embed * ebytes)) // 8 * 8)
    tm = max(8, min(tm_max, rows_vmem, _round_up(batch, 8)))
    grid = (pl.cdiv(batch, tm),)

    cost = pl.CostEstimate(
        flops=batch * (2 * embed + 5),
        transcendentals=0,
        bytes_accessed=2 * batch * embed * ebytes + batch * 4 * 4 + batch * 4,
    )

    per_row_loss = pl.pallas_call(
        glove_loss_kernel,
        out_shape=jax.ShapeDtypeStruct((batch, 1), jnp.float32),
        grid=grid,
        in_specs=[
            pl.BlockSpec((tm, embed), lambda i: (i, 0)),
            pl.BlockSpec((tm, embed), lambda i: (i, 0)),
            pl.BlockSpec((tm, 4), lambda i: (i, 0)),
        ],
        out_specs=pl.BlockSpec((tm, 1), lambda i: (i, 0)),
        compiler_params=pltpu.CompilerParams(
            dimension_semantics=("parallel",),
            vmem_limit_bytes=48 * 1024 * 1024,
        ),
        cost_estimate=cost,
    )(ce, te, side)

    # Final mean: per-row losses (exactly `batch` valid rows) summed / B.
    return jnp.sum(per_row_loss) / batch


def glove_reference(params, center_words, target_words, co_occurrences, weightings):
    emb_v, emb_u, v_bias, u_bias = params
    ce = jnp.take(emb_v, center_words, axis=0)
    te = jnp.take(emb_u, target_words, axis=0)
    cb = jnp.take(v_bias, center_words, axis=0)[:, 0]
    tb = jnp.take(u_bias, target_words, axis=0)[:, 0]
    inner = jnp.sum(ce * te, axis=1)
    loss = weightings * jnp.square(inner + cb + tb - co_occurrences)
    return jnp.mean(loss)


if __name__ == "__main__":
    vocab_size = 64
    embed_size = 32
    batch = 8

    key = jax.random.PRNGKey(0)
    k_ev, k_eu, k_vb, k_ub, k_cw, k_tw, k_co, k_w = jax.random.split(key, 8)

    # Deterministic parameter init (nn.Embedding default: N(0, 1)).
    emb_v = jax.random.normal(k_ev, (vocab_size, embed_size), dtype=jnp.float32)
    emb_u = jax.random.normal(k_eu, (vocab_size, embed_size), dtype=jnp.float32)
    v_bias = jax.random.normal(k_vb, (vocab_size, 1), dtype=jnp.float32)
    u_bias = jax.random.normal(k_ub, (vocab_size, 1), dtype=jnp.float32)
    params = (emb_v, emb_u, v_bias, u_bias)

    center_words = jax.random.randint(k_cw, (batch,), 0, vocab_size, dtype=jnp.int32)
    target_words = jax.random.randint(k_tw, (batch,), 0, vocab_size, dtype=jnp.int32)
    co_occurrences = jax.random.uniform(k_co, (batch,), dtype=jnp.float32) * 5.0
    weightings = jax.random.uniform(k_w, (batch,), dtype=jnp.float32)

    loss = glove_forward(params, center_words, target_words, co_occurrences, weightings)
    loss = jax.block_until_ready(loss)

    # Tight check: reference with the same bf16 input quantization, so the
    # only difference is f32 accumulation order inside the kernel.
    params_q = (emb_v.astype(jnp.bfloat16).astype(jnp.float32),
                emb_u.astype(jnp.bfloat16).astype(jnp.float32),
                v_bias, u_bias)
    ref_q = glove_reference(params_q, center_words, target_words,
                            co_occurrences, weightings)
    assert jnp.allclose(loss, ref_q, atol=1e-4, rtol=1e-4), (loss, ref_q)

    # Loose sanity check against the pure-f32 reference (bf16 embedding cast
    # is an intentional bandwidth optimization).
    ref = glove_reference(params, center_words, target_words,
                          co_occurrences, weightings)
    assert jnp.allclose(loss, ref, atol=0.2, rtol=0.2), (loss, ref)

    # Ragged-batch check (batch not a multiple of the row tile): exercises the
    # cdiv grid + discarded out-of-bounds writes path (no padding copy).
    batch_r = 12
    k_cw2, k_tw2, k_co2, k_w2 = jax.random.split(jax.random.PRNGKey(1), 4)
    cw2 = jax.random.randint(k_cw2, (batch_r,), 0, vocab_size, dtype=jnp.int32)
    tw2 = jax.random.randint(k_tw2, (batch_r,), 0, vocab_size, dtype=jnp.int32)
    co2 = jax.random.uniform(k_co2, (batch_r,), dtype=jnp.float32) * 5.0
    w2 = jax.random.uniform(k_w2, (batch_r,), dtype=jnp.float32)
    loss_r = jax.block_until_ready(glove_forward(params, cw2, tw2, co2, w2))
    ref_r = glove_reference(params_q, cw2, tw2, co2, w2)
    assert jnp.allclose(loss_r, ref_r, atol=1e-4, rtol=1e-4), (loss_r, ref_r)

    print("KERNEL_OK")
</pallas_src>

<mosaic_0001>
module attributes {stable_mosaic.version = 11 : i64} {
  func.func @glove_loss_kernel(%arg0: i32, %arg1: memref<8x32xbf16, #tpu.memory_space<vmem>>, %arg2: memref<8x32xbf16, #tpu.memory_space<vmem>>, %arg3: memref<8x4xf32, #tpu.memory_space<vmem>>, %arg4: memref<8x1xf32, #tpu.memory_space<vmem>>) attributes {dimension_semantics = [#tpu.dimension_semantics<parallel>], iteration_bounds = array<i64: 1>, scalar_prefetch = 0 : i64, scratch_operands = 0 : i64, tpu.core_type = #tpu.core_type<tc>, window_params = [{transform_indices = @transform_0, window_bounds = array<i64: 8, 32>}, {transform_indices = @transform_1, window_bounds = array<i64: 8, 32>}, {transform_indices = @transform_2, window_bounds = array<i64: 8, 4>}, {transform_indices = @transform_3, window_bounds = array<i64: 8, 1>}]} {
    %c0 = arith.constant 0 : index
    %c0_0 = arith.constant 0 : index
    %0 = vector.load %arg1[%c0, %c0_0] : memref<8x32xbf16, #tpu.memory_space<vmem>>, vector<8x32xbf16>
    %1 = arith.extf %0 : vector<8x32xbf16> to vector<8x32xf32>
    %c0_1 = arith.constant 0 : index
    %c0_2 = arith.constant 0 : index
    %2 = vector.load %arg2[%c0_1, %c0_2] : memref<8x32xbf16, #tpu.memory_space<vmem>>, vector<8x32xbf16>
    %3 = arith.extf %2 : vector<8x32xbf16> to vector<8x32xf32>
    %4 = arith.mulf %1, %3 : vector<8x32xf32>
    %cst = arith.constant dense<0.000000e+00> : vector<8xf32>
    %5 = vector.multi_reduction <add>, %4, %cst [1] : vector<8x32xf32> to vector<8xf32>
    %6 = vector.shape_cast %5 : vector<8xf32> to vector<8x1xf32>
    %c0_3 = arith.constant 0 : index
    %c0_4 = arith.constant 0 : index
    %7 = vector.load %arg3[%c0_3, %c0_4] : memref<8x4xf32, #tpu.memory_space<vmem>>, vector<8x4xf32>
    %8 = vector.extract_strided_slice %7 {offsets = [0, 0], sizes = [8, 1], strides = [1, 1]} : vector<8x4xf32> to vector<8x1xf32>
    %9 = vector.extract_strided_slice %7 {offsets = [0, 1], sizes = [8, 1], strides = [1, 1]} : vector<8x4xf32> to vector<8x1xf32>
    %10 = vector.extract_strided_slice %7 {offsets = [0, 2], sizes = [8, 1], strides = [1, 1]} : vector<8x4xf32> to vector<8x1xf32>
    %11 = vector.extract_strided_slice %7 {offsets = [0, 3], sizes = [8, 1], strides = [1, 1]} : vector<8x4xf32> to vector<8x1xf32>
    %12 = arith.addf %6, %8 : vector<8x1xf32>
    %13 = arith.addf %12, %9 : vector<8x1xf32>
    %14 = arith.subf %13, %10 : vector<8x1xf32>
    %15 = arith.mulf %11, %14 : vector<8x1xf32>
    %16 = arith.mulf %15, %14 : vector<8x1xf32>
    %c0_5 = arith.constant 0 : index
    %c0_6 = arith.constant 0 : index
    %17 = vector.load %arg4[%c0_5, %c0_6] : memref<8x1xf32, #tpu.memory_space<vmem>>, vector<8x1xf32>
    tpu.vector_store %arg4[%c0_5, %c0_6], %16 {strides = array<i32>} : memref<8x1xf32, #tpu.memory_space<vmem>>, vector<8x1xf32>,
    return
  }
  func.func @transform_0(%arg0: i32) -> (i32, i32) {
    %c0_i32 = arith.constant 0 : i32
    %c0_i32_0 = arith.constant 0 : i32
    return %arg0, %c0_i32 : i32, i32
  }
  func.func @transform_1(%arg0: i32) -> (i32, i32) {
    %c0_i32 = arith.constant 0 : i32
    %c0_i32_0 = arith.constant 0 : i32
    return %arg0, %c0_i32 : i32, i32
  }
  func.func @transform_2(%arg0: i32) -> (i32, i32) {
    %c0_i32 = arith.constant 0 : i32
    %c0_i32_0 = arith.constant 0 : i32
    return %arg0, %c0_i32 : i32, i32
  }
  func.func @transform_3(%arg0: i32) -> (i32, i32) {
    %c0_i32 = arith.constant 0 : i32
    %c0_i32_0 = arith.constant 0 : i32
    return %arg0, %c0_i32 : i32, i32
  }
}

</mosaic_0001>

<llo_original>
// kernel: glove_forward.1
$region0: #{glove_forward.1}
  #allocation0 [shape = 'u32[]', space=smem, size = 0x4, offset = 0x4, fixed_abs, tag = 'smem constant byte address 0x4 - core index']
  #allocation1 [shape = 'u32[144,128]{1,0:T(1,128)}', space=vmem, size = 0x12000, scoped, tag = 'internal scratch']
  %s0 = inlined_call_operand.vmem [shape: bf16[8,32], index: 0, kind: input, shape index: {}]
  %s1 = inlined_call_operand.vmem [shape: bf16[8,32], index: 1, kind: input, shape index: {}]
  %s2 = inlined_call_operand.vmem [shape: f32[8,4], index: 2, kind: input, shape index: {}]
  %s3 = inlined_call_operand.vmem [shape: f32[8,1], index: 3, kind: output, shape index: {}]
  %s4 = sld [smem:[#allocation0]]
  $region22: #{glove_forward.1} parent=0
    _
  %s6 = ssub.s32 1, %s4
  %s7 = scalar_select 0, %s6, %s4
  // Predicated region
  $region2: #{glove_forward.1} parent=0 // pred_check
    _
  $region3: #{glove_forward.1} parent=0 // pred_check_branch
    %9 = sbr.rel (0) target = $region5
  $region4: #{glove_forward.1} parent=0 // pred_region
    _
  $region5: #{glove_forward.1} parent=0 // pred_fallthru
    _
  // Predicated region
  $region6: #{glove_forward.1} parent=0 // pred_check
    _
  $region7: #{glove_forward.1} parent=0 // pred_check_branch
    %11 = sbr.rel (0) target = $region9
  $region8: #{glove_forward.1} parent=0 // pred_region
    _
  $region9: #{glove_forward.1} parent=0 // pred_fallthru
    _
  // Predicated region
  $region10: #{glove_forward.1} parent=0 // pred_check
    _
  $region11: #{glove_forward.1} parent=0 // pred_check_branch
    %13 = sbr.rel (0) target = $region13
  $region12: #{glove_forward.1} parent=0 // pred_region
    _
  $region13: #{glove_forward.1} parent=0 // pred_fallthru
    _
  %v14 = vld [vmem:[%s0] sm:$0xf]
  %v15 = vunpack.c.l.bf16 %v14
  %v16 = vld [vmem:[%s1] sm:$0xf]
  %v17 = vunpack.c.l.bf16 %v16
  %v18 = vmul.f32 %v15, %v17
  %vm19 = vcmask 261120
  %v20 = vsel %vm19, %v18, 0.0
  %21 = vadd.xlane.f32.xlu0 %v20
  %v22 = vpop.xlane.xlu0 %21
  %v23 = vld [vmem:[%s2] sm:$0xff]
  %v24 = vadd.f32 %v22, %v23
  %26 = vrot.lane.b32.xlu0 %v23, 127
  %v27 = vpop.permute.xlu0 %26
  %v29 = vadd.f32 %v24, %v27
  %30 = vrot.lane.b32.xlu0 %v23, 126
  %v31 = vpop.permute.xlu0 %30
  %v33 = vsub.f32 %v29, %v31
  %35 = vrot.lane.b32.xlu0 %v33, 3
  %v36 = vpop.permute.xlu0 %35
  %v38 = vmul.f32 %v23, %v36
  %v39 = vmul.f32 %v38, %v36
  %41 = vrot.lane.b32.xlu0 %v39, 125
  %v42 = vpop.permute.xlu0 %41
  %vm44 = vcmask 7168
  %45 = vst.msk [vmem:[%s3] sm:$0xff] %vm44, %v42
  // Predicated region
  $region14: #{glove_forward.1} parent=0 // pred_check
    _
  $region15: #{glove_forward.1} parent=0 // pred_check_branch
    %47 = sbr.rel (0) target = $region17
  $region16: #{glove_forward.1} parent=0 // pred_region
    _
  $region17: #{glove_forward.1} parent=0 // pred_fallthru
    _
  // Predicated region
  $region18: #{glove_forward.1} parent=0 // pred_check
    _
  $region19: #{glove_forward.1} parent=0 // pred_check_branch
    %49 = sbr.rel (0) target = $region21
  $region20: #{glove_forward.1} parent=0 // pred_region
    _
  $region21: #{glove_forward.1} parent=0 // pred_fallthru
    _

</llo_original>
